<compile_context>
chip_gen: v5e
topology: v5e:2x2
jax: 0.10.0
libtpu: 0.0.40
codegen_flags: <defaults>
</compile_context>

<pallas_src>
import jax
import jax.numpy as jnp
from jax.experimental import pallas as pl
from jax.experimental.pallas import tpu as pltpu


# ------------------------------ Pallas kernel ------------------------------- #

def _dqn_fused_kernel(ei_ref, gx_ref, wg_ref, bg_ref, x_ref,
                      w1g_ref, w1x_ref, b1_ref,
                      w2_ref, b2_ref, w3_ref, b3_ref, o_ref):
    """Fully fused: edge_index -> pool weights -> mean-pooled GCNConv ->
    (concat-free) fcn1 -> fcn2 -> out -> log_softmax over the batch dim.

    NOTE: log_softmax normalizes over the BATCH dim (torch dim=0). That is only
    correct because the whole batch lives in this single grid step — do not tile
    or core-shard the batch axis of this kernel.
    """
    B, N, _ = gx_ref.shape
    E = ei_ref.shape[2]

    # ---- GCN normalization / mean-pool weights built in-kernel from edge_index.
    # p_j = (1/N) * d_j^{-1/2} * [ sum_{edges j->i} d_i^{-1/2} + d_j^{-1/2} ],
    # d = in-degree of A+I (PyG gcn_norm). Duplicate edges accumulate as in PyG.
    ei = ei_ref[...]                                            # (B, 2, E) int32
    src = ei[:, 0, :]                                           # (B, E)
    dst = ei[:, 1, :]                                           # (B, E)
    node_ids = jax.lax.broadcasted_iota(jnp.int32, (B, E, N), 2)
    oh_src = jnp.where(src[:, :, None] == node_ids, 1.0, 0.0)   # (B, E, N)
    oh_dst = jnp.where(dst[:, :, None] == node_ids, 1.0, 0.0)   # (B, E, N)
    deg = 1.0 + jnp.sum(oh_dst, axis=1)                         # (B, N)  +1 self-loop
    dinv = jax.lax.rsqrt(deg)                                   # (B, N)
    dinv_dst = jnp.sum(oh_dst * dinv[:, None, :], axis=2)       # (B, E) == dinv[dst]
    colsum = jnp.sum(oh_src * dinv_dst[:, :, None], axis=1)     # (B, N)
    p = dinv * (colsum + dinv) * (1.0 / N)                      # (B, N)

    # ---- mean-pooled GCNConv with the (linear) mean hoisted before the matmul.
    pooled = jnp.sum(p[:, :, None] * gx_ref[...], axis=1)                 # (B, F)
    g = jnp.dot(pooled, wg_ref[...], preferred_element_type=jnp.float32)  # (B, F)
    g = g + bg_ref[...]

    def leaky_relu(v):  # torch default negative_slope = 0.01 (f32 VPU path)
        return jnp.where(v > 0, v, 0.01 * v)

    # ---- fcn1 with W1 split row-wise: equivalent to concat(g, x) @ W1 + b1,
    #      but no concat is ever materialized.
    h = (jnp.dot(g.astype(jnp.bfloat16), w1g_ref[...],
                 preferred_element_type=jnp.float32)
         + jnp.dot(x_ref[...].astype(jnp.bfloat16), w1x_ref[...],
                   preferred_element_type=jnp.float32)
         + b1_ref[...])
    h = leaky_relu(h)
    h = jnp.dot(h.astype(jnp.bfloat16), w2_ref[...],
                preferred_element_type=jnp.float32) + b2_ref[...]
    h = leaky_relu(h)
    logits = jnp.dot(h.astype(jnp.bfloat16), w3_ref[...],
                     preferred_element_type=jnp.float32) + b3_ref[...]

    # F.log_softmax(x, dim=0): normalize over the batch dimension (stable form).
    m = jnp.max(logits, axis=0, keepdims=True)
    z = logits - m
    lse = jnp.log(jnp.sum(jnp.exp(z), axis=0, keepdims=True))
    o_ref[...] = z - lse


# ------------------------------- Wrappers ----------------------------------- #

def _full_spec(shape):
    """Whole-array block (single grid step)."""
    return pl.BlockSpec(shape, lambda i, _nd=len(shape): (0,) * _nd)


def dqn_forward(params, x, gcn_x, gcn_edge_index):
    """Batch-mode forward of DQNNetwork as a single fused pallas_call."""
    # TODO(synk): only the batched (is_batch=True) tensor path is implemented;
    # the non-batch path / ModelInput container has no Pallas-side equivalent.
    B, N, _ = gcn_x.shape
    O = params["w3"].shape[1]
    args = (gcn_edge_index.astype(jnp.int32), gcn_x,
            params["w_gcn"], params["b_gcn"], x,
            params["w1g"], params["w1x"], params["b1"],
            params["w2"], params["b2"], params["w3"], params["b3"])
    out = pl.pallas_call(
        _dqn_fused_kernel,
        out_shape=jax.ShapeDtypeStruct((B, O), jnp.float32),
        grid=(1,),
        in_specs=[_full_spec(a.shape) for a in args],
        out_specs=_full_spec((B, O)),
        compiler_params=pltpu.CompilerParams(
            dimension_semantics=("arbitrary",)),
    )(*args)
    # torch: `x if self.outdim == 1 else x.squeeze(0)` (squeeze only if size-1 dim)
    if O != 1 and out.shape[0] == 1:
        out = out[0]
    return out


def init_params(key, gcn_indim, in_dim, out_dim):
    """Deterministic synthetic parameters (torch Linear shapes, stored transposed)."""
    h1, h2 = in_dim * 4, in_dim * 8
    ks = jax.random.split(key, 4)

    def lin(k, fan_in, fan_out):
        kw, kb = jax.random.split(k)
        s = 1.0 / jnp.sqrt(fan_in)
        w = jax.random.uniform(kw, (fan_in, fan_out), jnp.float32, -s, s)
        b = jax.random.uniform(kb, (1, fan_out), jnp.float32, -s, s)
        return w, b

    w_gcn, b_gcn = lin(ks[0], gcn_indim, gcn_indim)
    w1, b1 = lin(ks[1], in_dim, h1)
    w2, b2 = lin(ks[2], h1, h2)
    w3, b3 = lin(ks[3], h2, out_dim)
    # fcn1 weight split row-wise so the kernel never needs a concat; MLP weights
    # stored bf16 (halves dominant weight DMA, MXU-native), biases stay f32.
    return dict(
        w_gcn=w_gcn, b_gcn=b_gcn,
        w1g=w1[:gcn_indim].astype(jnp.bfloat16),
        w1x=w1[gcn_indim:].astype(jnp.bfloat16),
        b1=b1,
        w2=w2.astype(jnp.bfloat16), b2=b2,
        w3=w3.astype(jnp.bfloat16), b3=b3,
    )


if __name__ == "__main__":
    key = jax.random.PRNGKey(0)
    B, N, E = 2, 8, 12               # batch, graph nodes, edges per graph
    gcn_indim = 16
    x_dim = 16
    in_dim = gcn_indim + x_dim       # concat(gcn_mean, x) feeds fcn1
    out_dim = 4

    kp, kx, kg, ke = jax.random.split(key, 4)
    params = init_params(kp, gcn_indim, in_dim, out_dim)
    x = jax.random.normal(kx, (B, x_dim), jnp.float32)
    gcn_x = jax.random.normal(kg, (B, N, gcn_indim), jnp.float32)
    gcn_edge_index = jax.random.randint(ke, (B, 2, E), 0, N, jnp.int32)

    out = jax.jit(dqn_forward)(params, x, gcn_x, gcn_edge_index)
    jax.block_until_ready(out)
    assert out.shape == (B, out_dim)
    assert bool(jnp.all(jnp.isfinite(out)))
    print("KERNEL_OK")
</pallas_src>

<mosaic_0001>
module attributes {stable_mosaic.version = 11 : i64} {
  func.func @_dqn_fused_kernel(%arg0: i32, %arg1: memref<2x2x12xi32, #tpu.memory_space<vmem>>, %arg2: memref<2x8x16xf32, #tpu.memory_space<vmem>>, %arg3: memref<16x16xf32, #tpu.memory_space<vmem>>, %arg4: memref<1x16xf32, #tpu.memory_space<vmem>>, %arg5: memref<2x16xf32, #tpu.memory_space<vmem>>, %arg6: memref<16x128xbf16, #tpu.memory_space<vmem>>, %arg7: memref<16x128xbf16, #tpu.memory_space<vmem>>, %arg8: memref<1x128xf32, #tpu.memory_space<vmem>>, %arg9: memref<128x256xbf16, #tpu.memory_space<vmem>>, %arg10: memref<1x256xf32, #tpu.memory_space<vmem>>, %arg11: memref<256x4xbf16, #tpu.memory_space<vmem>>, %arg12: memref<1x4xf32, #tpu.memory_space<vmem>>, %arg13: memref<2x4xf32, #tpu.memory_space<vmem>>) attributes {dimension_semantics = [#tpu.dimension_semantics<arbitrary>], iteration_bounds = array<i64: 1>, scalar_prefetch = 0 : i64, scratch_operands = 0 : i64, tpu.core_type = #tpu.core_type<tc>, window_params = [{pipeline_mode = #tpu.pipeline_mode<synchronous>, transform_indices = @transform_0, window_bounds = array<i64: 2, 2, 12>}, {pipeline_mode = #tpu.pipeline_mode<synchronous>, transform_indices = @transform_1, window_bounds = array<i64: 2, 8, 16>}, {pipeline_mode = #tpu.pipeline_mode<synchronous>, transform_indices = @transform_2, window_bounds = array<i64: 16, 16>}, {pipeline_mode = #tpu.pipeline_mode<synchronous>, transform_indices = @transform_3, window_bounds = array<i64: 1, 16>}, {pipeline_mode = #tpu.pipeline_mode<synchronous>, transform_indices = @transform_4, window_bounds = array<i64: 2, 16>}, {pipeline_mode = #tpu.pipeline_mode<synchronous>, transform_indices = @transform_5, window_bounds = array<i64: 16, 128>}, {pipeline_mode = #tpu.pipeline_mode<synchronous>, transform_indices = @transform_6, window_bounds = array<i64: 16, 128>}, {pipeline_mode = #tpu.pipeline_mode<synchronous>, transform_indices = @transform_7, window_bounds = array<i64: 1, 128>}, {pipeline_mode = #tpu.pipeline_mode<synchronous>, transform_indices = @transform_8, window_bounds = array<i64: 128, 256>}, {pipeline_mode = #tpu.pipeline_mode<synchronous>, transform_indices = @transform_9, window_bounds = array<i64: 1, 256>}, {pipeline_mode = #tpu.pipeline_mode<synchronous>, transform_indices = @transform_10, window_bounds = array<i64: 256, 4>}, {pipeline_mode = #tpu.pipeline_mode<synchronous>, transform_indices = @transform_11, window_bounds = array<i64: 1, 4>}, {pipeline_mode = #tpu.pipeline_mode<synchronous>, transform_indices = @transform_12, window_bounds = array<i64: 2, 4>}]} {
    %c0 = arith.constant 0 : index
    %c0_0 = arith.constant 0 : index
    %c0_1 = arith.constant 0 : index
    %0 = vector.load %arg1[%c0, %c0_0, %c0_1] : memref<2x2x12xi32, #tpu.memory_space<vmem>>, vector<2x2x12xi32>
    %1 = vector.extract_strided_slice %0 {offsets = [0, 0, 0], sizes = [2, 1, 12], strides = [1, 1, 1]} : vector<2x2x12xi32> to vector<2x1x12xi32>
    %2 = vector.shape_cast %1 : vector<2x1x12xi32> to vector<2x12xi32>
    %3 = vector.extract_strided_slice %0 {offsets = [0, 1, 0], sizes = [2, 1, 12], strides = [1, 1, 1]} : vector<2x2x12xi32> to vector<2x1x12xi32>
    %4 = vector.shape_cast %3 : vector<2x1x12xi32> to vector<2x12xi32>
    %5 = tpu.iota {dimensions = array<i32: 2>} : vector<2x12x8xi32>
    %6 = vector.shape_cast %2 : vector<2x12xi32> to vector<2x12x1xi32>
    %7 = vector.broadcast %6 : vector<2x12x1xi32> to vector<2x12x8xi32>
    %8 = arith.cmpi eq, %7, %5 : vector<2x12x8xi32>
    %cst = arith.constant 1.000000e+00 : f32
    %cst_2 = arith.constant 0.000000e+00 : f32
    %9 = vector.broadcast %cst : f32 to vector<2x12x8xf32>
    %10 = vector.broadcast %cst_2 : f32 to vector<2x12x8xf32>
    %11 = arith.select %8, %9, %10 : vector<2x12x8xi1>, vector<2x12x8xf32>
    %12 = vector.shape_cast %4 : vector<2x12xi32> to vector<2x12x1xi32>
    %13 = vector.broadcast %12 : vector<2x12x1xi32> to vector<2x12x8xi32>
    %14 = arith.cmpi eq, %13, %5 : vector<2x12x8xi32>
    %cst_3 = arith.constant 1.000000e+00 : f32
    %cst_4 = arith.constant 0.000000e+00 : f32
    %15 = vector.broadcast %cst_3 : f32 to vector<2x12x8xf32>
    %16 = vector.broadcast %cst_4 : f32 to vector<2x12x8xf32>
    %17 = arith.select %14, %15, %16 : vector<2x12x8xi1>, vector<2x12x8xf32>
    %cst_5 = arith.constant dense<0.000000e+00> : vector<2x8xf32>
    %18 = vector.multi_reduction <add>, %17, %cst_5 [1] : vector<2x12x8xf32> to vector<2x8xf32>
    %cst_6 = arith.constant 1.000000e+00 : f32
    %19 = vector.broadcast %cst_6 : f32 to vector<2x8xf32>
    %20 = arith.addf %19, %18 : vector<2x8xf32>
    %21 = math.rsqrt %20 : vector<2x8xf32>
    %22 = vector.shape_cast %21 : vector<2x8xf32> to vector<2x1x8xf32>
    %23 = vector.broadcast %22 : vector<2x1x8xf32> to vector<2x12x8xf32>
    %24 = arith.mulf %17, %23 : vector<2x12x8xf32>
    %cst_7 = arith.constant dense<0.000000e+00> : vector<2x12xf32>
    %25 = vector.multi_reduction <add>, %24, %cst_7 [2] : vector<2x12x8xf32> to vector<2x12xf32>
    %26 = vector.shape_cast %25 : vector<2x12xf32> to vector<2x12x1xf32>
    %27 = vector.broadcast %26 : vector<2x12x1xf32> to vector<2x12x8xf32>
    %28 = arith.mulf %11, %27 : vector<2x12x8xf32>
    %cst_8 = arith.constant dense<0.000000e+00> : vector<2x8xf32>
    %29 = vector.multi_reduction <add>, %28, %cst_8 [1] : vector<2x12x8xf32> to vector<2x8xf32>
    %30 = arith.addf %29, %21 : vector<2x8xf32>
    %31 = arith.mulf %21, %30 : vector<2x8xf32>
    %cst_9 = arith.constant 1.250000e-01 : f32
    %32 = vector.broadcast %cst_9 : f32 to vector<2x8xf32>
    %33 = arith.mulf %31, %32 : vector<2x8xf32>
    %34 = vector.shape_cast %33 : vector<2x8xf32> to vector<2x8x1xf32>
    %c0_10 = arith.constant 0 : index
    %c0_11 = arith.constant 0 : index
    %c0_12 = arith.constant 0 : index
    %35 = vector.load %arg2[%c0_10, %c0_11, %c0_12] : memref<2x8x16xf32, #tpu.memory_space<vmem>>, vector<2x8x16xf32>
    %36 = vector.broadcast %34 : vector<2x8x1xf32> to vector<2x8x16xf32>
    %37 = arith.mulf %36, %35 : vector<2x8x16xf32>
    %cst_13 = arith.constant dense<0.000000e+00> : vector<2x16xf32>
    %38 = vector.multi_reduction <add>, %37, %cst_13 [1] : vector<2x8x16xf32> to vector<2x16xf32>
    %c0_14 = arith.constant 0 : index
    %c0_15 = arith.constant 0 : index
    %39 = vector.load %arg3[%c0_14, %c0_15] : memref<16x16xf32, #tpu.memory_space<vmem>>, vector<16x16xf32>
    %cst_16 = arith.constant dense<0.000000e+00> : vector<2x16xf32>
    %40 = tpu.matmul %38, %39, %cst_16 {dimension_numbers = #tpu.dot_dimension_numbers<[1], [0], [0], [1], [0, 0, 1, 1], [], []>} : vector<2x16xf32>, vector<16x16xf32>, vector<2x16xf32> -> vector<2x16xf32>
    %c0_17 = arith.constant 0 : index
    %c0_18 = arith.constant 0 : index
    %41 = vector.load %arg4[%c0_17, %c0_18] : memref<1x16xf32, #tpu.memory_space<vmem>>, vector<1x16xf32>
    %42 = vector.broadcast %41 : vector<1x16xf32> to vector<2x16xf32>
    %43 = arith.addf %40, %42 : vector<2x16xf32>
    %44 = arith.truncf %43 : vector<2x16xf32> to vector<2x16xbf16>
    %c0_19 = arith.constant 0 : index
    %c0_20 = arith.constant 0 : index
    %45 = vector.load %arg6[%c0_19, %c0_20] : memref<16x128xbf16, #tpu.memory_space<vmem>>, vector<16x128xbf16>
    %cst_21 = arith.constant dense<0.000000e+00> : vector<2x128xf32>
    %46 = tpu.matmul %44, %45, %cst_21 {dimension_numbers = #tpu.dot_dimension_numbers<[1], [0], [0], [1], [0, 0, 1, 1], [], []>} : vector<2x16xbf16>, vector<16x128xbf16>, vector<2x128xf32> -> vector<2x128xf32>
    %c0_22 = arith.constant 0 : index
    %c0_23 = arith.constant 0 : index
    %47 = vector.load %arg5[%c0_22, %c0_23] : memref<2x16xf32, #tpu.memory_space<vmem>>, vector<2x16xf32>
    %48 = arith.truncf %47 : vector<2x16xf32> to vector<2x16xbf16>
    %c0_24 = arith.constant 0 : index
    %c0_25 = arith.constant 0 : index
    %49 = vector.load %arg7[%c0_24, %c0_25] : memref<16x128xbf16, #tpu.memory_space<vmem>>, vector<16x128xbf16>
    %cst_26 = arith.constant dense<0.000000e+00> : vector<2x128xf32>
    %50 = tpu.matmul %48, %49, %cst_26 {dimension_numbers = #tpu.dot_dimension_numbers<[1], [0], [0], [1], [0, 0, 1, 1], [], []>} : vector<2x16xbf16>, vector<16x128xbf16>, vector<2x128xf32> -> vector<2x128xf32>
    %51 = arith.addf %46, %50 : vector<2x128xf32>
    %c0_27 = arith.constant 0 : index
    %c0_28 = arith.constant 0 : index
    %52 = vector.load %arg8[%c0_27, %c0_28] : memref<1x128xf32, #tpu.memory_space<vmem>>, vector<1x128xf32>
    %53 = vector.broadcast %52 : vector<1x128xf32> to vector<2x128xf32>
    %54 = arith.addf %51, %53 : vector<2x128xf32>
    %cst_29 = arith.constant 0.000000e+00 : f32
    %55 = vector.broadcast %cst_29 : f32 to vector<2x128xf32>
    %56 = arith.cmpf ogt, %54, %55 : vector<2x128xf32>
    %cst_30 = arith.constant 0.00999999977 : f32
    %57 = vector.broadcast %cst_30 : f32 to vector<2x128xf32>
    %58 = arith.mulf %57, %54 : vector<2x128xf32>
    %59 = arith.select %56, %54, %58 : vector<2x128xi1>, vector<2x128xf32>
    %60 = arith.truncf %59 : vector<2x128xf32> to vector<2x128xbf16>
    %c0_31 = arith.constant 0 : index
    %c0_32 = arith.constant 0 : index
    %61 = vector.load %arg9[%c0_31, %c0_32] : memref<128x256xbf16, #tpu.memory_space<vmem>>, vector<128x256xbf16>
    %cst_33 = arith.constant dense<0.000000e+00> : vector<2x256xf32>
    %62 = tpu.matmul %60, %61, %cst_33 {dimension_numbers = #tpu.dot_dimension_numbers<[1], [0], [0], [1], [0, 0, 1, 1], [], []>} : vector<2x128xbf16>, vector<128x256xbf16>, vector<2x256xf32> -> vector<2x256xf32>
    %c0_34 = arith.constant 0 : index
    %c0_35 = arith.constant 0 : index
    %63 = vector.load %arg10[%c0_34, %c0_35] : memref<1x256xf32, #tpu.memory_space<vmem>>, vector<1x256xf32>
    %64 = vector.broadcast %63 : vector<1x256xf32> to vector<2x256xf32>
    %65 = arith.addf %62, %64 : vector<2x256xf32>
    %cst_36 = arith.constant 0.000000e+00 : f32
    %66 = vector.broadcast %cst_36 : f32 to vector<2x256xf32>
    %67 = arith.cmpf ogt, %65, %66 : vector<2x256xf32>
    %cst_37 = arith.constant 0.00999999977 : f32
    %68 = vector.broadcast %cst_37 : f32 to vector<2x256xf32>
    %69 = arith.mulf %68, %65 : vector<2x256xf32>
    %70 = arith.select %67, %65, %69 : vector<2x256xi1>, vector<2x256xf32>
    %71 = arith.truncf %70 : vector<2x256xf32> to vector<2x256xbf16>
    %c0_38 = arith.constant 0 : index
    %c0_39 = arith.constant 0 : index
    %72 = vector.load %arg11[%c0_38, %c0_39] : memref<256x4xbf16, #tpu.memory_space<vmem>>, vector<256x4xbf16>
    %cst_40 = arith.constant dense<0.000000e+00> : vector<2x4xf32>
    %73 = tpu.matmul %71, %72, %cst_40 {dimension_numbers = #tpu.dot_dimension_numbers<[1], [0], [0], [1], [0, 0, 1, 1], [], []>} : vector<2x256xbf16>, vector<256x4xbf16>, vector<2x4xf32> -> vector<2x4xf32>
    %c0_41 = arith.constant 0 : index
    %c0_42 = arith.constant 0 : index
    %74 = vector.load %arg12[%c0_41, %c0_42] : memref<1x4xf32, #tpu.memory_space<vmem>>, vector<1x4xf32>
    %75 = vector.broadcast %74 : vector<1x4xf32> to vector<2x4xf32>
    %76 = arith.addf %73, %75 : vector<2x4xf32>
    %cst_43 = arith.constant dense<0xFF800000> : vector<4xf32>
    %77 = vector.multi_reduction <maximumf>, %76, %cst_43 [0] : vector<2x4xf32> to vector<4xf32>
    %78 = vector.shape_cast %77 : vector<4xf32> to vector<1x4xf32>
    %79 = vector.broadcast %78 : vector<1x4xf32> to vector<2x4xf32>
    %80 = arith.subf %76, %79 : vector<2x4xf32>
    %81 = math.exp %80 : vector<2x4xf32>
    %cst_44 = arith.constant dense<0.000000e+00> : vector<4xf32>
    %82 = vector.multi_reduction <add>, %81, %cst_44 [0] : vector<2x4xf32> to vector<4xf32>
    %83 = vector.shape_cast %82 : vector<4xf32> to vector<1x4xf32>
    %84 = math.log %83 : vector<1x4xf32>
    %85 = vector.broadcast %84 : vector<1x4xf32> to vector<2x4xf32>
    %86 = arith.subf %80, %85 : vector<2x4xf32>
    %c0_45 = arith.constant 0 : index
    %c0_46 = arith.constant 0 : index
    %87 = vector.load %arg13[%c0_45, %c0_46] : memref<2x4xf32, #tpu.memory_space<vmem>>, vector<2x4xf32>
    tpu.vector_store %arg13[%c0_45, %c0_46], %86 {strides = array<i32>} : memref<2x4xf32, #tpu.memory_space<vmem>>, vector<2x4xf32>,
    return
  }
  func.func @transform_0(%arg0: i32) -> (i32, i32, i32) {
    %c0_i32 = arith.constant 0 : i32
    %c0_i32_0 = arith.constant 0 : i32
    %c0_i32_1 = arith.constant 0 : i32
    %c0_i32_2 = arith.constant 0 : i32
    return %c0_i32, %c0_i32_0, %c0_i32_1 : i32, i32, i32
  }
  func.func @transform_1(%arg0: i32) -> (i32, i32, i32) {
    %c0_i32 = arith.constant 0 : i32
    %c0_i32_0 = arith.constant 0 : i32
    %c0_i32_1 = arith.constant 0 : i32
    %c0_i32_2 = arith.constant 0 : i32
    return %c0_i32, %c0_i32_0, %c0_i32_1 : i32, i32, i32
  }
  func.func @transform_2(%arg0: i32) -> (i32, i32) {
    %c0_i32 = arith.constant 0 : i32
    %c0_i32_0 = arith.constant 0 : i32
    %c0_i32_1 = arith.constant 0 : i32
    return %c0_i32, %c0_i32_0 : i32, i32
  }
  func.func @transform_3(%arg0: i32) -> (i32, i32) {
    %c0_i32 = arith.constant 0 : i32
    %c0_i32_0 = arith.constant 0 : i32
    %c0_i32_1 = arith.constant 0 : i32
    return %c0_i32, %c0_i32_0 : i32, i32
  }
  func.func @transform_4(%arg0: i32) -> (i32, i32) {
    %c0_i32 = arith.constant 0 : i32
    %c0_i32_0 = arith.constant 0 : i32
    %c0_i32_1 = arith.constant 0 : i32
    return %c0_i32, %c0_i32_0 : i32, i32
  }
  func.func @transform_5(%arg0: i32) -> (i32, i32) {
    %c0_i32 = arith.constant 0 : i32
    %c0_i32_0 = arith.constant 0 : i32
    %c0_i32_1 = arith.constant 0 : i32
    return %c0_i32, %c0_i32_0 : i32, i32
  }
  func.func @transform_6(%arg0: i32) -> (i32, i32) {
    %c0_i32 = arith.constant 0 : i32
    %c0_i32_0 = arith.constant 0 : i32
    %c0_i32_1 = arith.constant 0 : i32
    return %c0_i32, %c0_i32_0 : i32, i32
  }
  func.func @transform_7(%arg0: i32) -> (i32, i32) {
    %c0_i32 = arith.constant 0 : i32
    %c0_i32_0 = arith.constant 0 : i32
    %c0_i32_1 = arith.constant 0 : i32
    return %c0_i32, %c0_i32_0 : i32, i32
  }
  func.func @transform_8(%arg0: i32) -> (i32, i32) {
    %c0_i32 = arith.constant 0 : i32
    %c0_i32_0 = arith.constant 0 : i32
    %c0_i32_1 = arith.constant 0 : i32
    return %c0_i32, %c0_i32_0 : i32, i32
  }
  func.func @transform_9(%arg0: i32) -> (i32, i32) {
    %c0_i32 = arith.constant 0 : i32
    %c0_i32_0 = arith.constant 0 : i32
    %c0_i32_1 = arith.constant 0 : i32
    return %c0_i32, %c0_i32_0 : i32, i32
  }
  func.func @transform_10(%arg0: i32) -> (i32, i32) {
    %c0_i32 = arith.constant 0 : i32
    %c0_i32_0 = arith.constant 0 : i32
    %c0_i32_1 = arith.constant 0 : i32
    return %c0_i32, %c0_i32_0 : i32, i32
  }
  func.func @transform_11(%arg0: i32) -> (i32, i32) {
    %c0_i32 = arith.constant 0 : i32
    %c0_i32_0 = arith.constant 0 : i32
    %c0_i32_1 = arith.constant 0 : i32
    return %c0_i32, %c0_i32_0 : i32, i32
  }
  func.func @transform_12(%arg0: i32) -> (i32, i32) {
    %c0_i32 = arith.constant 0 : i32
    %c0_i32_0 = arith.constant 0 : i32
    %c0_i32_1 = arith.constant 0 : i32
    return %c0_i32, %c0_i32_0 : i32, i32
  }
}

</mosaic_0001>

<llo_original>
// kernel: dqn_forward.1
$region0: #{dqn_forward.1}
  #allocation0 [shape = 'u32[]', space=smem, size = 0x4, offset = 0x4, fixed_abs, tag = 'smem constant byte address 0x4 - core index']
  #allocation1 [shape = 'u32[72,128]{1,0:T(1,128)}', space=vmem, size = 0x9000, scoped, tag = 'internal scratch']
  %s0 = inlined_call_operand.vmem [shape: s32[2,2,12], index: 0, kind: input, shape index: {}]
  %s1 = inlined_call_operand.hbm [shape: f32[2,8,16], index: 1, kind: input, shape index: {}]
  %s2 = inlined_call_operand.hbm [shape: f32[16,16], index: 2, kind: input, shape index: {}]
  %s3 = inlined_call_operand.hbm [shape: f32[1,16], index: 3, kind: input, shape index: {}]
  %s4 = inlined_call_operand.vmem [shape: f32[2,16], index: 4, kind: input, shape index: {}]
  %s5 = inlined_call_operand.hbm [shape: bf16[16,128], index: 5, kind: input, shape index: {}]
  %s6 = inlined_call_operand.hbm [shape: bf16[16,128], index: 6, kind: input, shape index: {}]
  %s7 = inlined_call_operand.hbm [shape: f32[1,128], index: 7, kind: input, shape index: {}]
  %s8 = inlined_call_operand.vmem [shape: bf16[128,256], index: 8, kind: input, shape index: {}]
  %s9 = inlined_call_operand.hbm [shape: f32[1,256], index: 9, kind: input, shape index: {}]
  %s10 = inlined_call_operand.vmem [shape: bf16[256,4], index: 10, kind: input, shape index: {}]
  %s11 = inlined_call_operand.hbm [shape: f32[1,4], index: 11, kind: input, shape index: {}]
  %s12 = inlined_call_operand.hbm [shape: f32[2,4], index: 12, kind: output, shape index: {}]
  %s13 = sld [smem:[#allocation0]]
  $region90: #{dqn_forward.1} parent=0
    _
  %s15 = ssub.s32 1, %s13
  %s16 = scalar_select 0, %s15, %s13
  $region1: #{dqn_forward.1} parent=0
    #allocation2 [shape = 'u8[8192]{0}', space=vmem, size = 0x2000, scoped, tag = 'input window, operand 1, single buffered']
    #allocation3 [shape = 's32[1]{0}', space=sflag, size = 0x4, scoped, tag = 'scoped memory for dqn_forward.1']
    #allocation4 [shape = 's32[1]{0}', space=sflag, size = 0x4, scoped, tag = 'scoped memory for dqn_forward.1']
    #allocation5 [shape = 'u8[8192]{0}', space=vmem, size = 0x2000, scoped, tag = 'input window, operand 2, single buffered']
    #allocation6 [shape = 's32[1]{0}', space=sflag, size = 0x4, scoped, tag = 'scoped memory for dqn_forward.1']
    #allocation7 [shape = 'u8[512]{0}', space=vmem, size = 0x400, scoped, tag = 'input window, operand 3, single buffered']
    #allocation8 [shape = 'u8[4096]{0}', space=vmem, size = 0x1000, scoped, tag = 'input window, operand 5, single buffered']
    #allocation9 [shape = 's32[1]{0}', space=sflag, size = 0x4, scoped, tag = 'scoped memory for dqn_forward.1']
    #allocation10 [shape = 'u8[4096]{0}', space=vmem, size = 0x1000, scoped, tag = 'input window, operand 6, single buffered']
    #allocation11 [shape = 'u8[512]{0}', space=vmem, size = 0x400, scoped, tag = 'input window, operand 7, single buffered']
    #allocation12 [shape = 's32[1]{0}', space=sflag, size = 0x4, scoped, tag = 'scoped memory for dqn_forward.1']
    #allocation13 [shape = 'u8[1024]{0}', space=vmem, size = 0x400, scoped, tag = 'input window, operand 9, single buffered']
    #allocation14 [shape = 'u8[512]{0}', space=vmem, size = 0x400, scoped, tag = 'input window, operand 11, single buffered']
    #allocation15 [shape = 's32[1]{0}', space=sflag, size = 0x4, scoped, tag = 'scoped memory for dqn_forward.1']
    #allocation16 [shape = 'u8[1024]{0}', space=vmem, size = 0x400, scoped, tag = 'output window, operand 0, single buffered']
    %17 = vsyncpa [#allocation3], 0
    %18 = vsyncpa [#allocation6], 0
    %19 = vsyncpa [#allocation9], 0
    %20 = vsyncpa [#allocation12], 0
    %21 = vsyncpa [#allocation15], 0
    %22 = vsyncpa [#allocation4], 0
    // Predicated region
    $region2: #{dqn_forward.1} parent=1 // pred_check
      _
    $region3: #{dqn_forward.1} parent=1 // pred_check_branch
      %24 = sbr.rel (0) target = $region5
    $region4: #{dqn_forward.1} parent=1 // pred_region
      _
    $region5: #{dqn_forward.1} parent=1 // pred_fallthru
      _
    // Predicated region
    $region6: #{dqn_forward.1} parent=1 // pred_check
      _
    $region7: #{dqn_forward.1} parent=1 // pred_check_branch
      %26 = sbr.rel (0) target = $region9
    $region8: #{dqn_forward.1} parent=1 // pred_region
      %28 = vsyncadd [#allocation3], 0
      %s29 = sshll.u32 %s1, 4
      %s30 = int_to_ptr.hbm [resolvable:$true] %s29
      %s31 = sshll.u32 [#allocation2], 4
      %s32 = int_to_ptr.vmem [resolvable:$true] %s31
      %37 = dma.hbm_to_vmem [thread:$0]  %s30, 256, %s32, [#allocation3], 128, 128, 8
    $region9: #{dqn_forward.1} parent=1 // pred_fallthru
      _
    // Predicated region
    $region10: #{dqn_forward.1} parent=1 // pred_check
      _
    $region11: #{dqn_forward.1} parent=1 // pred_check_branch
      %39 = sbr.rel (0) target = $region13
    $region12: #{dqn_forward.1} parent=1 // pred_region
      %41 = vsyncadd [#allocation6], 0
      %s42 = sshll.u32 %s2, 4
      %s43 = int_to_ptr.hbm [resolvable:$true] %s42
      %s44 = sshll.u32 [#allocation5], 4
      %s45 = int_to_ptr.vmem [resolvable:$true] %s44
      %50 = dma.hbm_to_vmem [thread:$0]  %s43, 256, %s45, [#allocation6], 128, 128, 8
    $region13: #{dqn_forward.1} parent=1 // pred_fallthru
      _
    // Predicated region
    $region14: #{dqn_forward.1} parent=1 // pred_check
      _
    $region15: #{dqn_forward.1} parent=1 // pred_check_branch
      %52 = sbr.rel (0) target = $region17
    $region16: #{dqn_forward.1} parent=1 // pred_region
      %54 = vsyncadd [#allocation6], 0
      %s56 = sshll.u32 %s3, 4
      %s57 = int_to_ptr.hbm [resolvable:$true] %s56
      %s58 = sshll.u32 [#allocation7], 4
      %s59 = int_to_ptr.vmem [resolvable:$true] %s58
      %61 = dma.hbm_to_vmem [thread:$0]  %s57, 16, %s59, [#allocation6]
    $region17: #{dqn_forward.1} parent=1 // pred_fallthru
      _
    // Predicated region
    $region18: #{dqn_forward.1} parent=1 // pred_check
      _
    $region19: #{dqn_forward.1} parent=1 // pred_check_branch
      %63 = sbr.rel (0) target = $region21
    $region20: #{dqn_forward.1} parent=1 // pred_region
      _
    $region21: #{dqn_forward.1} parent=1 // pred_fallthru
      _
    // Predicated region
    $region22: #{dqn_forward.1} parent=1 // pred_check
      _
    $region23: #{dqn_forward.1} parent=1 // pred_check_branch
      %65 = sbr.rel (0) target = $region25
    $region24: #{dqn_forward.1} parent=1 // pred_region
      %67 = vsyncadd [#allocation9], 0
      %s68 = sshll.u32 %s5, 4
      %s69 = int_to_ptr.hbm [resolvable:$true] %s68
      %s70 = sshll.u32 [#allocation8], 4
      %s71 = int_to_ptr.vmem [resolvable:$true] %s70
      %76 = dma.hbm_to_vmem [thread:$0]  %s69, 128, %s71, [#allocation9], 64, 64, 4
    $region25: #{dqn_forward.1} parent=1 // pred_fallthru
      _
    // Predicated region
    $region26: #{dqn_forward.1} parent=1 // pred_check
      _
    $region27: #{dqn_forward.1} parent=1 // pred_check_branch
      %78 = sbr.rel (0) target = $region29
    $region28: #{dqn_forward.1} parent=1 // pred_region
      %80 = vsyncadd [#allocation9], 0
      %s81 = sshll.u32 %s6, 4
      %s82 = int_to_ptr.hbm [resolvable:$true] %s81
      %s83 = sshll.u32 [#allocation10], 4
      %s84 = int_to_ptr.vmem [resolvable:$true] %s83
      %89 = dma.hbm_to_vmem [thread:$0]  %s82, 128, %s84, [#allocation9], 64, 64, 4
    $region29: #{dqn_forward.1} parent=1 // pred_fallthru
      _
    // Predicated region
    $region30: #{dqn_forward.1} parent=1 // pred_check
      _
    $region31: #{dqn_forward.1} parent=1 // pred_check_branch
      %91 = sbr.rel (0) target = $region33
    $region32: #{dqn_forward.1} parent=1 // pred_region
      %93 = vsyncadd [#allocation12], 0
      %s95 = sshll.u32 %s7, 4
      %s96 = int_to_ptr.hbm [resolvable:$true] %s95
      %s97 = sshll.u32 [#allocation11], 4
      %s98 = int_to_ptr.vmem [resolvable:$true] %s97
      %100 = dma.hbm_to_vmem [thread:$0]  %s96, 16, %s98, [#allocation12]
    $region33: #{dqn_forward.1} parent=1 // pred_fallthru
      _
    // Predicated region
    $region34: #{dqn_forward.1} parent=1 // pred_check
      _
    $region35: #{dqn_forward.1} parent=1 // pred_check_branch
      %102 = sbr.rel (0) target = $region37
    $region36: #{dqn_forward.1} parent=1 // pred_region
      _
    $region37: #{dqn_forward.1} parent=1 // pred_fallthru
      _
    // Predicated region
    $region38: #{dqn_forward.1} parent=1 // pred_check
      _
    $region39: #{dqn_forward.1} parent=1 // pred_check_branch
      %104 = sbr.rel (0) target = $region41
    $region40: #{dqn_forward.1} parent=1 // pred_region
      %106 = vsyncadd [#allocation12], 0
      %s108 = sshll.u32 %s9, 4
      %s109 = int_to_ptr.hbm [resolvable:$true] %s108
      %s110 = sshll.u32 [#allocation13], 4
      %s111 = int_to_ptr.vmem [resolvable:$true] %s110
      %113 = dma.hbm_to_vmem [thread:$0]  %s109, 32, %s111, [#allocation12]
    $region41: #{dqn_forward.1} parent=1 // pred_fallthru
      _
    // Predicated region
    $region42: #{dqn_forward.1} parent=1 // pred_check
      _
    $region43: #{dqn_forward.1} parent=1 // pred_check_branch
      %115 = sbr.rel (0) target = $region45
    $region44: #{dqn_forward.1} parent=1 // pred_region
      _
    $region45: #{dqn_forward.1} parent=1 // pred_fallthru
      _
    // Predicated region
    $region46: #{dqn_forward.1} parent=1 // pred_check
      _
    $region47: #{dqn_forward.1} parent=1 // pred_check_branch
      %117 = sbr.rel (0) target = $region49
    $region48: #{dqn_forward.1} parent=1 // pred_region
      %119 = vsyncadd [#allocation15], 0
      %s121 = sshll.u32 %s11, 4
      %s122 = int_to_ptr.hbm [resolvable:$true] %s121
      %s123 = sshll.u32 [#allocation14], 4
      %s124 = int_to_ptr.vmem [resolvable:$true] %s123
      %126 = dma.hbm_to_vmem [thread:$0]  %s122, 16, %s124, [#allocation15]
    $region49: #{dqn_forward.1} parent=1 // pred_fallthru
      _
    // Predicated region
    $region50: #{dqn_forward.1} parent=1 // pred_check
      _
    $region51: #{dqn_forward.1} parent=1 // pred_check_branch
      %128 = sbr.rel (0) target = $region53
    $region52: #{dqn_forward.1} parent=1 // pred_region
      %130 = dma.done [#allocation3], 256
    $region53: #{dqn_forward.1} parent=1 // pred_fallthru
      _
    // Predicated region
    $region54: #{dqn_forward.1} parent=1 // pred_check
      _
    $region55: #{dqn_forward.1} parent=1 // pred_check_branch
      %132 = sbr.rel (0) target = $region57
    $region56: #{dqn_forward.1} parent=1 // pred_region
      %134 = dma.done [#allocation6], 256
    $region57: #{dqn_forward.1} parent=1 // pred_fallthru
      _
    // Predicated region
    $region58: #{dqn_forward.1} parent=1 // pred_check
      _
    $region59: #{dqn_forward.1} parent=1 // pred_check_branch
      %136 = sbr.rel (0) target = $region61
    $region60: #{dqn_forward.1} parent=1 // pred_region
      %138 = dma.done [#allocation6], 16
    $region61: #{dqn_forward.1} parent=1 // pred_fallthru
      _
    // Predicated region
    $region62: #{dqn_forward.1} parent=1 // pred_check
      _
    $region63: #{dqn_forward.1} parent=1 // pred_check_branch
      %140 = sbr.rel (0) target = $region65
    $region64: #{dqn_forward.1} parent=1 // pred_region
      %142 = dma.done [#allocation9], 128
    $region65: #{dqn_forward.1} parent=1 // pred_fallthru
      _
    // Predicated region
    $region66: #{dqn_forward.1} parent=1 // pred_check
      _
    $region67: #{dqn_forward.1} parent=1 // pred_check_branch
      %144 = sbr.rel (0) target = $region69
    $region68: #{dqn_forward.1} parent=1 // pred_region
      %146 = dma.done [#allocation9], 128
    $region69: #{dqn_forward.1} parent=1 // pred_fallthru
      _
    // Predicated region
    $region70: #{dqn_forward.1} parent=1 // pred_check
      _
    $region71: #{dqn_forward.1} parent=1 // pred_check_branch
      %148 = sbr.rel (0) target = $region73
    $region72: #{dqn_forward.1} parent=1 // pred_region
      %150 = dma.done [#allocation12], 16
    $region73: #{dqn_forward.1} parent=1 // pred_fallthru
      _
    // Predicated region
    $region74: #{dqn_forward.1} parent=1 // pred_check
      _
    $region75: #{dqn_forward.1} parent=1 // pred_check_branch
      %152 = sbr.rel (0) target = $region77
    $region76: #{dqn_forward.1} parent=1 // pred_region
      %154 = dma.done [#allocation12], 32
    $region77: #{dqn_forward.1} parent=1 // pred_fallthru
      _
    // Predicated region
    $region78: #{dqn_forward.1} parent=1 // pred_check
      _
    $region79: #{dqn_forward.1} parent=1 // pred_check_branch
      %156 = sbr.rel (0) target = $region81
    $region80: #{dqn_forward.1} parent=1 // pred_region
      %158 = dma.done [#allocation15], 16
    $region81: #{dqn_forward.1} parent=1 // pred_fallthru
      _
    %v160 = vld [vmem:[%s0] sm:$0x3]
    %v161 = vld [vmem:[%s0 + $0x2] sm:$0x3]
    %v162 = vlaneseq
    %v163 = vand.u32 %v162, 127
    %v164 = vperm.slane %v160, 0
    %v165 = vlaneseq
    %v166 = vshrl.u32 %v165, 7
    %168 = vset.pattern.permute.xlu0 %v166
    %169 = vperm.xlu0 %168, %v164
    %v170 = vpop.permute.xlu0 %169
    %v171 = vlaneseq
    %v172 = vshrl.u32 %v171, 7
    %v173 = vadd.s32 %v172, 8
    %174 = vset.pattern.permute.xlu0 %v173
    %175 = vperm.xlu0 %174, %v164
    %v176 = vpop.permute.xlu0 %175
    %v177 = vperm.slane %v161, 0
    %v178 = vlaneseq
    %v179 = vshrl.u32 %v178, 7
    %181 = vset.pattern.permute.xlu0 %v179
    %182 = vperm.xlu0 %181, %v177
    %v183 = vpop.permute.xlu0 %182
    %v184 = vlaneseq
    %v185 = vshrl.u32 %v184, 7
    %v186 = vadd.s32 %v185, 8
    %187 = vset.pattern.permute.xlu0 %v186
    %188 = vperm.xlu0 %187, %v177
    %v189 = vpop.permute.xlu0 %188
    %vm190 = vcmp.eq.s32.totalorder %v170, %v163
    %vm191 = vcmp.eq.s32.totalorder %v176, %v163
    %vm192 = vcmp.eq.s32.totalorder %v183, %v163
    %vm193 = vcmp.eq.s32.totalorder %v189, %v163
    %v194 = vsel %vm190, 1.0, 0.0
    %v195 = vsel %vm191, 1.0, 0.0
    %v196 = vsel %vm192, 1.0, 0.0
    %v197 = vsel %vm193, 1.0, 0.0
    %v198 = vperm.slane %v160, 1
    %v199 = vlaneseq
    %v200 = vshrl.u32 %v199, 7
    %202 = vset.pattern.permute.xlu0 %v200
    %203 = vperm.xlu0 %202, %v198
    %v204 = vpop.permute.xlu0 %203
    %v205 = vlaneseq
    %v206 = vshrl.u32 %v205, 7
    %v207 = vadd.s32 %v206, 8
    %208 = vset.pattern.permute.xlu0 %v207
    %209 = vperm.xlu0 %208, %v198
    %v210 = vpop.permute.xlu0 %209
    %v211 = vperm.slane %v161, 1
    %v212 = vlaneseq
    %v213 = vshrl.u32 %v212, 7
    %215 = vset.pattern.permute.xlu0 %v213
    %216 = vperm.xlu0 %215, %v211
    %v217 = vpop.permute.xlu0 %216
    %v218 = vlaneseq
    %v219 = vshrl.u32 %v218, 7
    %v220 = vadd.s32 %v219, 8
    %221 = vset.pattern.permute.xlu0 %v220
    %222 = vperm.xlu0 %221, %v211
    %v223 = vpop.permute.xlu0 %222
    %vm224 = vcmp.eq.s32.totalorder %v204, %v163
    %vm225 = vcmp.eq.s32.totalorder %v210, %v163
    %vm226 = vcmp.eq.s32.totalorder %v217, %v163
    %vm227 = vcmp.eq.s32.totalorder %v223, %v163
    %v228 = vsel %vm224, 1.0, 0.0
    %v229 = vsel %vm225, 1.0, 0.0
    %v230 = vsel %vm226, 1.0, 0.0
    %v231 = vsel %vm227, 1.0, 0.0
    %vm232 = vcmask 64512
    %v233 = vsel %vm232, %v228, 0.0
    %vm234 = vcmask 60416
    %v235 = vsel %vm234, %v229, 0.0
    %v236 = vadd.f32 %v233, %v235
    %v237 = vrot.slane %v236, 4
    %v238 = vadd.f32 %v236, %v237
    %v239 = vrot.slane %v238, 2
    %v240 = vadd.f32 %v238, %v239
    %v241 = vrot.slane %v240, 1
    %v242 = vadd.f32 %v240, %v241
    %v243 = vsel %vm232, %v230, 0.0
    %v244 = vsel %vm234, %v231, 0.0
    %v245 = vadd.f32 %v243, %v244
    %v246 = vrot.slane %v245, 4
    %v247 = vadd.f32 %v245, %v246
    %v248 = vrot.slane %v247, 2
    %v249 = vadd.f32 %v247, %v248
    %v250 = vrot.slane %v249, 1
    %v251 = vadd.f32 %v249, %v250
    %v252 = vadd.f32 %v242, 1.0
    %v253 = vadd.f32 %v251, 1.0
    %v254 = vrsqrt.pop %v252
    %v255 = vmul.f32 %v254, %v252
    %v256 = vmul.f32 %v255, %v254
    %v257 = vmul.f32 0.5, %v256
    %v258 = vsub.f32 1.5, %v257
    %v259 = vmul.f32 %v254, %v258
    %vm260 = vweird.f32 %v252
    %vm261 = vweird.f32 %v254
    %vm262 = vmor %vm260, %vm261
    %v263 = vsel %vm262, %v254, %v259
    %v264 = vrsqrt.pop %v253
    %v265 = vmul.f32 %v264, %v253
    %v266 = vmul.f32 %v265, %v264
    %v267 = vmul.f32 0.5, %v266
    %v268 = vsub.f32 1.5, %v267
    %v269 = vmul.f32 %v264, %v268
    %vm270 = vweird.f32 %v253
    %vm271 = vweird.f32 %v264
    %vm272 = vmor %vm270, %vm271
    %v273 = vsel %vm272, %v264, %v269
    %v274 = vmul.f32 %v228, %v263
    %v275 = vmul.f32 %v229, %v263
    %v276 = vmul.f32 %v230, %v273
    %v277 = vmul.f32 %v231, %v273
    %v278 = vsel %vm232, %v274, 0.0
    %279 = vadd.xlane.f32.xlu0 %v278
    %v280 = vpop.xlane.xlu0 %279
    %v281 = vsel %vm234, %v275, 0.0
    %282 = vadd.xlane.f32.xlu0 %v281
    %v283 = vpop.xlane.xlu0 %282
    %v284 = vsel %vm232, %v276, 0.0
    %285 = vadd.xlane.f32.xlu0 %v284
    %v286 = vpop.xlane.xlu0 %285
    %v287 = vsel %vm234, %v277, 0.0
    %288 = vadd.xlane.f32.xlu0 %v287
    %v289 = vpop.xlane.xlu0 %288
    %v290 = vmul.f32 %v194, %v280
    %v291 = vmul.f32 %v195, %v283
    %v292 = vmul.f32 %v196, %v286
    %v293 = vmul.f32 %v197, %v289
    %v294 = vsel %vm232, %v290, 0.0
    %v295 = vsel %vm234, %v291, 0.0
    %v296 = vadd.f32 %v294, %v295
    %v297 = vrot.slane %v296, 4
    %v298 = vadd.f32 %v296, %v297
    %v299 = vrot.slane %v298, 2
    %v300 = vadd.f32 %v298, %v299
    %v301 = vrot.slane %v300, 1
    %v302 = vadd.f32 %v300, %v301
    %v303 = vsel %vm232, %v292, 0.0
    %v304 = vsel %vm234, %v293, 0.0
    %v305 = vadd.f32 %v303, %v304
    %v306 = vrot.slane %v305, 4
    %v307 = vadd.f32 %v305, %v306
    %v308 = vrot.slane %v307, 2
    %v309 = vadd.f32 %v307, %v308
    %v310 = vrot.slane %v309, 1
    %v311 = vadd.f32 %v309, %v310
    %v312 = vadd.f32 %v302, %v263
    %v313 = vadd.f32 %v311, %v273
    %v314 = vmul.f32 %v263, %v312
    %v315 = vmul.f32 %v273, %v313
    %v316 = vmul.f32 %v314, 0.125
    %v317 = vmul.f32 %v315, 0.125
    %v318 = vlaneseq
    %v319 = vshrl.u32 %v318, 7
    %321 = vset.pattern.permute.xlu0 %v319
    %322 = vperm.xlu0 %321, %v316
    %v323 = vpop.permute.xlu0 %322
    %v324 = vlaneseq
    %v325 = vshrl.u32 %v324, 7
    %327 = vset.pattern.permute.xlu0 %v325
    %328 = vperm.xlu0 %327, %v317
    %v329 = vpop.permute.xlu0 %328
    %v330 = vld [vmem:[#allocation2] sm:$0xff]
    %v331 = vld [vmem:[#allocation2 + $0x8] sm:$0xff]
    %v332 = vmul.f32 %v323, %v330
    %v333 = vmul.f32 %v329, %v331
    %vm334 = vcmask 130048
    %v335 = vsel %vm334, %v332, 0.0
    %v336 = vrot.slane %v335, 4
    %v337 = vadd.f32 %v335, %v336
    %v338 = vrot.slane %v337, 2
    %v339 = vadd.f32 %v337, %v338
    %v340 = vrot.slane %v339, 1
    %v341 = vadd.f32 %v339, %v340
    %v342 = vsel %vm334, %v333, 0.0
    %v343 = vrot.slane %v342, 4
    %v344 = vadd.f32 %v342, %v343
    %v345 = vrot.slane %v344, 2
    %v346 = vadd.f32 %v344, %v345
    %v347 = vrot.slane %v346, 1
    %v348 = vadd.f32 %v346, %v347
    %v349 = vld [vmem:[#allocation5] sm:$0xff]
    %v350 = vld [vmem:[#allocation5 + $0x8] sm:$0xff]
    %v351 = vld [vmem:[#allocation7] sm:$0x1]
    %v353 = vperm.slane %v351, 0
    %vm357 = vcmask 1041409
    %v358 = vsel %vm357, %v348, %v341
    %v359 = vsel %vm334, %v358, 0
    %361 = vmatpush.msra.mxu0 0.0
    %362 = vmatpush.msra.mxu0 0.0
    %363 = vmatpush.msra.mxu0 0.0
    %364 = vmatpush.msra.mxu0 0.0
    %365 = vmatpush.msra.mxu0 0.0
    %366 = vmatpush.msra.mxu0 0.0
    %367 = vmatpush.msra.mxu0 0.0
    %368 = vmatpush.msra.mxu0 0.0
    %369 = vmatpush.msra.mxu0 0.0
    %370 = vmatpush.msra.mxu0 0.0
    %371 = vmatpush.msra.mxu0 0.0
    %372 = vmatpush.msra.mxu0 0.0
    %373 = vmatpush.msra.mxu0 0.0
    %374 = vmatpush.msra.mxu0 0.0
    %375 = vmatpush.msra.mxu0 %v350
    %376 = vmatpush.msra.mxu0 %v349
    %377 = vmatmul.f32.gmra.mxu0 %v359
    %v378 = vpop.f32.mrf.mxu0
    %v379 = vadd.f32 %v353, %v378
    %380 = vdwg.mxu0
    %v381 = vpack.c.bf16 %v379, %v379
    %v382 = vld [vmem:[#allocation8] sm:$0xf]
    %v383 = vld [vmem:[#allocation8 + $0x4] sm:$0xf]
    %v384 = vld [vmem:[%s4] sm:$0x3]
    %v385 = vpack.c.bf16 %v384, %v384
    %v386 = vld [vmem:[#allocation10] sm:$0xf]
    %v387 = vld [vmem:[#allocation10 + $0x4] sm:$0xf]
    %v390 = vunpack.c.l.b16 %v386
    %v391 = vunpack.c.l.b16 %v387
    %v392 = vpack.c.b16 %v391, %v390
    %v395 = vsel %vm334, %v385, 0
    %397 = vmatpush.bf16.msra.mxu0 0
    %398 = vmatpush.bf16.msra.mxu0 0
    %399 = vmatpush.bf16.msra.mxu0 0
    %400 = vmatpush.bf16.msra.mxu0 0
    %401 = vmatpush.bf16.msra.mxu0 0
    %402 = vmatpush.bf16.msra.mxu0 0
    %403 = vmatpush.bf16.msra.mxu0 0
    %404 = vmatpush.bf16.msra.mxu0 %v392
    %405 = vmatmul.bf16.gmra.mxu0 %v395
    %v406 = vpop.f32.mrf.mxu0
    %v407 = vadd.f32 0.0, %v406
    %v408 = vpop.f32.mrf.mxu0
    %409 = vdwg.mxu0
    %v412 = vunpack.c.l.b16 %v382
    %v413 = vunpack.c.l.b16 %v383
    %v414 = vpack.c.b16 %v413, %v412
    %v417 = vsel %vm334, %v381, 0
    %419 = vmatpush.bf16.msra.mxu0 0
    %420 = vmatpush.bf16.msra.mxu0 0
    %421 = vmatpush.bf16.msra.mxu0 0
    %422 = vmatpush.bf16.msra.mxu0 0
    %423 = vmatpush.bf16.msra.mxu0 0
    %424 = vmatpush.bf16.msra.mxu0 0
    %425 = vmatpush.bf16.msra.mxu0 0
    %426 = vmatpush.bf16.msra.mxu0 %v414
    %427 = vmatmul.bf16.gmra.mxu0 %v417
    %v428 = vpop.f32.mrf.mxu0
    %v429 = vadd.f32 %v407, %v428
    %v430 = vpop.f32.mrf.mxu0
    %431 = vdwg.mxu0
    %v432 = vld [vmem:[#allocation11] sm:$0x1]
    %v434 = vperm.slane %v432, 0
    %v436 = vadd.f32 %v429, %v434
    %vm437 = vcmp.gt.f32.partialorder %v436, 0.0
    %v438 = vmul.f32 %v436, 0.01
    %v439 = vsel %vm437, %v436, %v438
    %v440 = vpack.c.bf16 %v439, %v439
    %v441 = vld [vmem:[%s8] sm:$0xff]
    %v442 = vld [vmem:[%s8 + $0x8] sm:$0xff]
    %v443 = vld [vmem:[%s8 + $0x10] sm:$0xff]
    %v444 = vld [vmem:[%s8 + $0x18] sm:$0xff]
    %v445 = vld [vmem:[%s8 + $0x20] sm:$0xff]
    %v446 = vld [vmem:[%s8 + $0x28] sm:$0xff]
    %v447 = vld [vmem:[%s8 + $0x30] sm:$0xff]
    %v448 = vld [vmem:[%s8 + $0x38] sm:$0xff]
    %v449 = vld [vmem:[%s8 + $0x40] sm:$0xff]
    %v450 = vld [vmem:[%s8 + $0x48] sm:$0xff]
    %v451 = vld [vmem:[%s8 + $0x50] sm:$0xff]
    %v452 = vld [vmem:[%s8 + $0x58] sm:$0xff]
    %v453 = vld [vmem:[%s8 + $0x60] sm:$0xff]
    %v454 = vld [vmem:[%s8 + $0x68] sm:$0xff]
    %v455 = vld [vmem:[%s8 + $0x70] sm:$0xff]
    %v456 = vld [vmem:[%s8 + $0x78] sm:$0xff]
    %v457 = vld [vmem:[#allocation13] sm:$0x3]
    %v459 = vperm.slane %v457, 0
    %v460 = vperm.slane %v457, 1
    %v479 = vunpack.c.l.b16 %v441
    %v480 = vunpack.c.h.b16 %v441
    %v481 = vunpack.c.l.b16 %v442
    %v482 = vunpack.c.h.b16 %v442
    %v483 = vunpack.c.l.b16 %v443
    %v484 = vunpack.c.h.b16 %v443
    %v485 = vunpack.c.l.b16 %v444
    %v486 = vunpack.c.h.b16 %v444
    %v487 = vunpack.c.l.b16 %v445
    %v488 = vunpack.c.h.b16 %v445
    %v489 = vunpack.c.l.b16 %v446
    %v490 = vunpack.c.h.b16 %v446
    %v491 = vunpack.c.l.b16 %v447
    %v492 = vunpack.c.h.b16 %v447
    %v493 = vunpack.c.l.b16 %v448
    %v494 = vunpack.c.h.b16 %v448
    %v495 = vunpack.c.l.b16 %v449
    %v496 = vunpack.c.h.b16 %v449
    %v497 = vunpack.c.l.b16 %v450
    %v498 = vunpack.c.h.b16 %v450
    %v499 = vunpack.c.l.b16 %v451
    %v500 = vunpack.c.h.b16 %v451
    %v501 = vunpack.c.l.b16 %v452
    %v502 = vunpack.c.h.b16 %v452
    %v503 = vunpack.c.l.b16 %v453
    %v504 = vunpack.c.h.b16 %v453
    %v505 = vunpack.c.l.b16 %v454
    %v506 = vunpack.c.h.b16 %v454
    %v507 = vunpack.c.l.b16 %v455
    %v508 = vunpack.c.h.b16 %v455
    %v509 = vunpack.c.l.b16 %v456
    %v510 = vunpack.c.h.b16 %v456
    %v511 = vpack.c.b16 %v481, %v479
    %v512 = vpack.c.b16 %v482, %v480
    %v513 = vpack.c.b16 %v485, %v483
    %v514 = vpack.c.b16 %v486, %v484
    %v515 = vpack.c.b16 %v489, %v487
    %v516 = vpack.c.b16 %v490, %v488
    %v517 = vpack.c.b16 %v493, %v491
    %v518 = vpack.c.b16 %v494, %v492
    %v519 = vpack.c.b16 %v497, %v495
    %v520 = vpack.c.b16 %v498, %v496
    %v521 = vpack.c.b16 %v501, %v499
    %v522 = vpack.c.b16 %v502, %v500
    %v523 = vpack.c.b16 %v505, %v503
    %v524 = vpack.c.b16 %v506, %v504
    %v525 = vpack.c.b16 %v509, %v507
    %v526 = vpack.c.b16 %v510, %v508
    %543 = vmatpush.bf16.msra.mxu0 %v525
    %544 = vmatpush.bf16.msra.mxu0 %v523
    %545 = vmatpush.bf16.msra.mxu0 %v521
    %546 = vmatpush.bf16.msra.mxu0 %v519
    %547 = vmatpush.bf16.msra.mxu0 %v517
    %548 = vmatpush.bf16.msra.mxu0 %v515
    %549 = vmatpush.bf16.msra.mxu0 %v513
    %550 = vmatpush.bf16.msra.mxu0 %v511
    %551 = vmatmul.bf16.gmra.mxu0 %v440
    %v552 = vpop.f32.mrf.mxu0
    %v553 = vadd.f32 %v459, %v552
    %v554 = vpop.f32.mrf.mxu0
    %555 = vdwg.mxu0
    %556 = vmatpush.bf16.msra.mxu0 %v526
    %557 = vmatpush.bf16.msra.mxu0 %v524
    %558 = vmatpush.bf16.msra.mxu0 %v522
    %559 = vmatpush.bf16.msra.mxu0 %v520
    %560 = vmatpush.bf16.msra.mxu0 %v518
    %561 = vmatpush.bf16.msra.mxu0 %v516
    %562 = vmatpush.bf16.msra.mxu0 %v514
    %563 = vmatpush.bf16.msra.mxu0 %v512
    %564 = vmatmul.bf16.gmra.mxu0 %v440
    %v565 = vpop.f32.mrf.mxu0
    %v566 = vadd.f32 %v460, %v565
    %v567 = vpop.f32.mrf.mxu0
    %568 = vdwg.mxu0
    %vm569 = vcmp.gt.f32.partialorder %v553, 0.0
    %vm570 = vcmp.gt.f32.partialorder %v566, 0.0
    %v571 = vmul.f32 %v553, 0.01
    %v572 = vmul.f32 %v566, 0.01
    %v573 = vsel %vm569, %v553, %v571
    %v574 = vsel %vm570, %v566, %v572
    %v575 = vpack.c.bf16 %v573, %v573
    %v576 = vpack.c.bf16 %v574, %v574
    %v577 = vld [vmem:[%s10] sm:$0xf]
    %v578 = vld [vmem:[%s10 + $0x4] sm:$0xf]
    %v579 = vld [vmem:[%s10 + $0x8] sm:$0xf]
    %v580 = vld [vmem:[%s10 + $0xc] sm:$0xf]
    %v581 = vld [vmem:[%s10 + $0x10] sm:$0xf]
    %v582 = vld [vmem:[%s10 + $0x14] sm:$0xf]
    %v583 = vld [vmem:[%s10 + $0x18] sm:$0xf]
    %v584 = vld [vmem:[%s10 + $0x1c] sm:$0xf]
    %v585 = vld [vmem:[%s10 + $0x20] sm:$0xf]
    %v586 = vld [vmem:[%s10 + $0x24] sm:$0xf]
    %v587 = vld [vmem:[%s10 + $0x28] sm:$0xf]
    %v588 = vld [vmem:[%s10 + $0x2c] sm:$0xf]
    %v589 = vld [vmem:[%s10 + $0x30] sm:$0xf]
    %v590 = vld [vmem:[%s10 + $0x34] sm:$0xf]
    %v591 = vld [vmem:[%s10 + $0x38] sm:$0xf]
    %v592 = vld [vmem:[%s10 + $0x3c] sm:$0xf]
    %v593 = vld [vmem:[%s10 + $0x40] sm:$0xf]
    %v594 = vld [vmem:[%s10 + $0x44] sm:$0xf]
    %v595 = vld [vmem:[%s10 + $0x48] sm:$0xf]
    %v596 = vld [vmem:[%s10 + $0x4c] sm:$0xf]
    %v597 = vld [vmem:[%s10 + $0x50] sm:$0xf]
    %v598 = vld [vmem:[%s10 + $0x54] sm:$0xf]
    %v599 = vld [vmem:[%s10 + $0x58] sm:$0xf]
    %v600 = vld [vmem:[%s10 + $0x5c] sm:$0xf]
    %v601 = vld [vmem:[%s10 + $0x60] sm:$0xf]
    %v602 = vld [vmem:[%s10 + $0x64] sm:$0xf]
    %v603 = vld [vmem:[%s10 + $0x68] sm:$0xf]
    %v604 = vld [vmem:[%s10 + $0x6c] sm:$0xf]
    %v605 = vld [vmem:[%s10 + $0x70] sm:$0xf]
    %v606 = vld [vmem:[%s10 + $0x74] sm:$0xf]
    %v607 = vld [vmem:[%s10 + $0x78] sm:$0xf]
    %v608 = vld [vmem:[%s10 + $0x7c] sm:$0xf]
    %v609 = vld [vmem:[#allocation14] sm:$0x1]
    %v611 = vperm.slane %v609, 0
    %v645 = vunpack.c.l.b16 %v577
    %v646 = vunpack.c.l.b16 %v578
    %v647 = vunpack.c.l.b16 %v579
    %v648 = vunpack.c.l.b16 %v580
    %v649 = vunpack.c.l.b16 %v581
    %v650 = vunpack.c.l.b16 %v582
    %v651 = vunpack.c.l.b16 %v583
    %v652 = vunpack.c.l.b16 %v584
    %v653 = vunpack.c.l.b16 %v585
    %v654 = vunpack.c.l.b16 %v586
    %v655 = vunpack.c.l.b16 %v587
    %v656 = vunpack.c.l.b16 %v588
    %v657 = vunpack.c.l.b16 %v589
    %v658 = vunpack.c.l.b16 %v590
    %v659 = vunpack.c.l.b16 %v591
    %v660 = vunpack.c.l.b16 %v592
    %v661 = vunpack.c.l.b16 %v593
    %v662 = vunpack.c.l.b16 %v594
    %v663 = vunpack.c.l.b16 %v595
    %v664 = vunpack.c.l.b16 %v596
    %v665 = vunpack.c.l.b16 %v597
    %v666 = vunpack.c.l.b16 %v598
    %v667 = vunpack.c.l.b16 %v599
    %v668 = vunpack.c.l.b16 %v600
    %v669 = vunpack.c.l.b16 %v601
    %v670 = vunpack.c.l.b16 %v602
    %v671 = vunpack.c.l.b16 %v603
    %v672 = vunpack.c.l.b16 %v604
    %v673 = vunpack.c.l.b16 %v605
    %v674 = vunpack.c.l.b16 %v606
    %v675 = vunpack.c.l.b16 %v607
    %v676 = vunpack.c.l.b16 %v608
    %v677 = vpack.c.b16 %v646, %v645
    %v678 = vpack.c.b16 %v648, %v647
    %v679 = vpack.c.b16 %v650, %v649
    %v680 = vpack.c.b16 %v652, %v651
    %v681 = vpack.c.b16 %v654, %v653
    %v682 = vpack.c.b16 %v656, %v655
    %v683 = vpack.c.b16 %v658, %v657
    %v684 = vpack.c.b16 %v660, %v659
    %v685 = vpack.c.b16 %v662, %v661
    %v686 = vpack.c.b16 %v664, %v663
    %v687 = vpack.c.b16 %v666, %v665
    %v688 = vpack.c.b16 %v668, %v667
    %v689 = vpack.c.b16 %v670, %v669
    %v690 = vpack.c.b16 %v672, %v671
    %v691 = vpack.c.b16 %v674, %v673
    %v692 = vpack.c.b16 %v676, %v675
    %709 = vmatpush.bf16.msra.mxu0 %v684
    %710 = vmatpush.bf16.msra.mxu0 %v683
    %711 = vmatpush.bf16.msra.mxu0 %v682
    %712 = vmatpush.bf16.msra.mxu0 %v681
    %713 = vmatpush.bf16.msra.mxu0 %v680
    %714 = vmatpush.bf16.msra.mxu0 %v679
    %715 = vmatpush.bf16.msra.mxu0 %v678
    %716 = vmatpush.bf16.msra.mxu0 %v677
    %717 = vmatmul.bf16.gmra.mxu0 %v575
    %v718 = vpop.f32.mrf.mxu0
    %v719 = vadd.f32 %v611, %v718
    %v720 = vpop.f32.mrf.mxu0
    %721 = vdwg.mxu0
    %722 = vmatpush.bf16.msra.mxu0 %v692
    %723 = vmatpush.bf16.msra.mxu0 %v691
    %724 = vmatpush.bf16.msra.mxu0 %v690
    %725 = vmatpush.bf16.msra.mxu0 %v689
    %726 = vmatpush.bf16.msra.mxu0 %v688
    %727 = vmatpush.bf16.msra.mxu0 %v687
    %728 = vmatpush.bf16.msra.mxu0 %v686
    %729 = vmatpush.bf16.msra.mxu0 %v685
    %730 = vmatmul.bf16.gmra.mxu0 %v576
    %v731 = vpop.f32.mrf.mxu0
    %v732 = vadd.f32 %v719, %v731
    %v733 = vpop.f32.mrf.mxu0
    %734 = vdwg.mxu0
    %vm735 = vcmask 25600
    %v736 = vsel %vm735, %v732, -inf
    %v737 = vrot.slane %v736, 4
    %v738 = vmax.f32 %v736, %v737
    %v739 = vrot.slane %v738, 2
    %v740 = vmax.f32 %v738, %v739
    %v741 = vrot.slane %v740, 1
    %v742 = vmax.f32 %v740, %v741
    %v743 = vsub.f32 %v732, %v742
    %v744 = vmul.f32 %v743, 1.442695
    %v745 = vpow.pop %v744
    %v746 = vsel %vm735, %v745, 0.0
    %v747 = vrot.slane %v746, 4
    %v748 = vadd.f32 %v746, %v747
    %v749 = vrot.slane %v748, 2
    %v750 = vadd.f32 %v748, %v749
    %v751 = vrot.slane %v750, 1
    %v752 = vadd.f32 %v750, %v751
    %v753 = vlog2.pop %v752
    %v754 = vmul.f32 %v753, 0.6931472
    %v755 = vsub.f32 %v743, %v754
    %756 = vst.msk [vmem:[#allocation16] sm:$0x3] %vm735, %v755
    // Predicated region
    $region82: #{dqn_forward.1} parent=1 // pred_check
      _
    $region83: #{dqn_forward.1} parent=1 // pred_check_branch
      %758 = sbr.rel (0) target = $region85
    $region84: #{dqn_forward.1} parent=1 // pred_region
      %760 = vsyncadd [#allocation4], 0
      %s762 = sshll.u32 [#allocation16], 4
      %s763 = int_to_ptr.vmem [resolvable:$true] %s762
      %s764 = sshll.u32 %s12, 4
      %s765 = int_to_ptr.hbm [resolvable:$true] %s764
      %767 = dma.vmem_to_hbm [thread:$0]  %s763, 32, %s765, [#allocation4]
    $region85: #{dqn_forward.1} parent=1 // pred_fallthru
      _
    // Predicated region
    $region86: #{dqn_forward.1} parent=1 // pred_check
      _
    $region87: #{dqn_forward.1} parent=1 // pred_check_branch
      %769 = sbr.rel (0) target = $region89
    $region88: #{dqn_forward.1} parent=1 // pred_region
      %771 = dma.done [#allocation4], 32
    $region89: #{dqn_forward.1} parent=1 // pred_fallthru
      _
    %772 = vsyncpa [#allocation3], 1
    %773 = vsyncpa [#allocation6], 1
    %774 = vsyncpa [#allocation9], 1
    %775 = vsyncpa [#allocation12], 1
    %776 = vsyncpa [#allocation15], 1
    %777 = vsyncpa [#allocation4], 1

</llo_original>
